<compile_context>
chip_gen: v5e
topology: v5e:2x2
jax: 0.10.0
libtpu: 0.0.40
codegen_flags: <defaults>
</compile_context>

<pallas_src>
import functools

import jax
import jax.numpy as jnp
from jax import lax
from jax.experimental import pallas as pl
from jax.experimental.pallas import tpu as pltpu

_NEG_BIG = -1e30


def _make_crs_kernel(emit_scores):
    def kernel(x_ref, wf_ref, bf_ref, llm_ref, idx_ref, embT_ref, ibias_ref,
               *refs):
        if emit_scores:
            m_out, l_out, tgt_out, score_ref = refs[0], refs[1], refs[2], refs[3]
            user_bf, m_sc, l_sc, tgt_sc = refs[4], refs[5], refs[6], refs[7]
        else:
            m_out, l_out, tgt_out = refs[0], refs[1], refs[2]
            score_ref = None
            user_bf, m_sc, l_sc, tgt_sc = refs[3], refs[4], refs[5], refs[6]

        s = pl.program_id(0)            # item-axis split (parallel / megacore)
        j = pl.program_id(1)            # tile within this split (arbitrary)
        n_inner = pl.num_programs(1)
        tile_n = embT_ref.shape[1]

        # ---- first tile of this split: fusion projection + state init ------
        # TODO(synk): UniMIND Fusion module source not provided; modeled as a
        # single linear projection over concat(sasrec_out, enc_hidden, dec_hidden).
        @pl.when(j == 0)
        def _():
            user = jnp.dot(x_ref[...], wf_ref[...],
                           preferred_element_type=jnp.float32)
            user = user + bf_ref[...] + llm_ref[...]
            user_bf[...] = user.astype(user_bf.dtype)      # bf16 once, reused
            m_sc[...] = jnp.full_like(m_sc, _NEG_BIG)
            l_sc[...] = jnp.zeros_like(l_sc)
            tgt_sc[...] = jnp.zeros_like(tgt_sc)

        # ---- per-tile scoring: (B, EMB) @ (EMB, tile_n) + bias (f32 acc) ----
        score = jnp.dot(user_bf[...], embT_ref[...],
                        preferred_element_type=jnp.float32)
        score = score + ibias_ref[...]
        if emit_scores:
            score_ref[...] = score                         # lane-dense f32 tile

        # ---- online logsumexp (f32) -----------------------------------------
        m_tile = jnp.max(score, axis=-1, keepdims=True)
        m_new = jnp.maximum(m_sc[...], m_tile)
        l_sc[...] = (l_sc[...] * jnp.exp(m_sc[...] - m_new)
                     + jnp.sum(jnp.exp(score - m_new), axis=-1, keepdims=True))
        m_sc[...] = m_new

        # ---- target-logit extraction (row iota broadcast vs B x N one-hot) --
        base = (s * n_inner + j) * tile_n
        col = lax.broadcasted_iota(jnp.int32, (1, tile_n), 1) + base
        hit = col == idx_ref[...]                           # (B_pad, tile_n)
        tgt_sc[...] += jnp.sum(jnp.where(hit, score, 0.0), axis=-1,
                               keepdims=True)

        # ---- last tile of this split: emit the partial LSE state ------------
        @pl.when(j == n_inner - 1)
        def _():
            m_out[0] = m_sc[...]
            l_out[0] = l_sc[...]
            tgt_out[0] = tgt_sc[...]

    return kernel


def cpt_crs_recommend(sequence_output, enc_hidden, dec_hidden, llm_emb,
                      fusion_w, fusion_b, item_emb, item_bias, item_indexes,
                      *, tile_n=8192, num_splits=2, return_scores=False):
    """Glue (concat / padding / transpose / dtype) in JAX; scoring + CE in Pallas.

    Assumes every label in item_indexes lies in [0, item_num); out-of-range
    labels would silently yield a wrong loss (mirrors the PyTorch lookup).
    """
    B = sequence_output.shape[0]
    x = jnp.concatenate([sequence_output, enc_hidden, dec_hidden], axis=-1)
    F_in = x.shape[1]
    EMB = fusion_w.shape[1]
    N = item_emb.shape[0]

    # Batch padded to a sublane multiple; padded rows are sliced off the loss.
    B_pad = ((B + 7) // 8) * 8

    # Item tiling: lane-dense tiles (tile_n % 128 == 0), capped to the padded
    # item count so tiny problems don't over-pad.
    tile_n = max(128, min(tile_n, ((N + 127) // 128) * 128))
    assert tile_n % 128 == 0
    n_tiles = pl.cdiv(N, tile_n)
    num_splits = max(1, min(num_splits, n_tiles))
    tiles_per_split = pl.cdiv(n_tiles, num_splits)
    n_tiles = num_splits * tiles_per_split
    N_pad = n_tiles * tile_n

    def pad_rows(a, rows):
        return jnp.pad(a, ((0, rows - a.shape[0]),) + ((0, 0),) * (a.ndim - 1))

    x_p = pad_rows(x, B_pad)
    llm_p = pad_rows(llm_emb, B_pad)
    idx_p = pad_rows(item_indexes.astype(jnp.int32).reshape(B, 1), B_pad)

    # NOTE: in production the frozen table is stored once as bf16 (EMB, N) in
    # HBM; the pad/cast/transpose here is only because this script builds it
    # in f32 row-major.
    embT = jnp.pad(item_emb, ((0, N_pad - N), (0, 0))).astype(jnp.bfloat16).T
    bias_p = jnp.pad(item_bias, (0, N_pad - N),
                     constant_values=_NEG_BIG).reshape(1, N_pad)
    bf = fusion_b.reshape(1, EMB)

    part_spec = pl.BlockSpec((1, B_pad, 1), lambda s, j: (s, 0, 0))
    out_shape = [
        jax.ShapeDtypeStruct((num_splits, B_pad, 1), jnp.float32),  # running max
        jax.ShapeDtypeStruct((num_splits, B_pad, 1), jnp.float32),  # running sum-exp
        jax.ShapeDtypeStruct((num_splits, B_pad, 1), jnp.float32),  # target logit
    ]
    out_specs = [part_spec, part_spec, part_spec]
    if return_scores:
        out_shape.append(jax.ShapeDtypeStruct((B_pad, N_pad), jnp.float32))
        out_specs.append(
            pl.BlockSpec((B_pad, tile_n),
                         lambda s, j: (0, s * tiles_per_split + j)))

    kernel = _make_crs_kernel(return_scores)
    outs = pl.pallas_call(
        kernel,
        grid_spec=pltpu.PrefetchScalarGridSpec(
            num_scalar_prefetch=0,
            grid=(num_splits, tiles_per_split),
            in_specs=[
                pl.BlockSpec((B_pad, F_in), lambda s, j: (0, 0)),   # concat features
                pl.BlockSpec((F_in, EMB), lambda s, j: (0, 0)),     # fusion W
                pl.BlockSpec((1, EMB), lambda s, j: (0, 0)),        # fusion b
                pl.BlockSpec((B_pad, EMB), lambda s, j: (0, 0)),    # llm item emb
                pl.BlockSpec((B_pad, 1), lambda s, j: (0, 0)),      # label indexes
                pl.BlockSpec((EMB, tile_n),                          # item table tile
                             lambda s, j: (0, s * tiles_per_split + j)),
                pl.BlockSpec((1, tile_n),                            # item bias tile
                             lambda s, j: (0, s * tiles_per_split + j)),
            ],
            out_specs=out_specs,
            scratch_shapes=[
                pltpu.VMEM((B_pad, EMB), jnp.bfloat16),  # user_rep (bf16, cast once)
                pltpu.VMEM((B_pad, 1), jnp.float32),     # running max
                pltpu.VMEM((B_pad, 1), jnp.float32),     # running sum-exp
                pltpu.VMEM((B_pad, 1), jnp.float32),     # target logit
            ],
        ),
        out_shape=out_shape,
        compiler_params=pltpu.CompilerParams(
            dimension_semantics=("parallel", "arbitrary"),
            vmem_limit_bytes=48 * 1024 * 1024),
    )(x_p, fusion_w, bf, llm_p, idx_p, embT, bias_p)

    m_p, l_p, tgt_p = outs[0], outs[1], outs[2]
    # Merge per-split partial logsumexps (tiny (num_splits, B) op in JAX).
    m_max = jnp.max(m_p, axis=0)                                     # (B_pad, 1)
    l_tot = jnp.sum(l_p * jnp.exp(m_p - m_max), axis=0)              # (B_pad, 1)
    lse = m_max + jnp.log(l_tot)
    tgt = jnp.sum(tgt_p, axis=0)
    loss = jnp.mean((lse - tgt)[:B, 0])

    if return_scores:
        return outs[3][:B, :N], loss
    return loss


def _xavier_uniform(key, shape):
    fan_in, fan_out = shape[0], shape[1]
    limit = (6.0 / (fan_in + fan_out)) ** 0.5
    return jax.random.uniform(key, shape, jnp.float32, -limit, limit)


if __name__ == "__main__":
    # Small, forward-consistent shapes.
    B = 2            # batch
    D_MODEL = 32     # cpt.config.d_model -> bart_size = 2 * D_MODEL = 64
    H_SAS = 32       # args.hidden_size (SASRec)
    EMB = 300        # item embedding dim (Fusion hidden_size)
    ITEM_NUM = 512   # args.item_num

    key = jax.random.PRNGKey(0)
    ks = jax.random.split(key, 8)

    # Stand-ins for frozen CPT / SASRec outputs (no source / checkpoint here).
    enc_hidden = jax.random.normal(ks[0], (B, D_MODEL), jnp.float32)
    dec_hidden = jax.random.normal(ks[1], (B, D_MODEL), jnp.float32)
    sequence_output = jax.random.normal(ks[2], (B, H_SAS), jnp.float32)

    F_in = H_SAS + 2 * D_MODEL
    fusion_w = _xavier_uniform(ks[3], (F_in, EMB))
    fusion_b = jnp.zeros((EMB,), jnp.float32)
    item_emb = _xavier_uniform(ks[4], (ITEM_NUM, EMB))        # nn.Embedding(item_num, 300)
    item_bias = jnp.zeros((ITEM_NUM,), jnp.float32)           # nn.Linear(300, item_num).bias

    item_indexes = jnp.array([3, 17], dtype=jnp.int32)
    assert int(jnp.min(item_indexes)) >= 0 and int(jnp.max(item_indexes)) < ITEM_NUM
    llm_item_indexes = jnp.array([5, 9], dtype=jnp.int32)
    llm_emb = item_emb[llm_item_indexes]                      # gather is glue

    # Validation path: small tiles, 2-way item split (exercises the partial
    # logsumexp merge), full score writeback for checking.
    score, loss = cpt_crs_recommend(sequence_output, enc_hidden, dec_hidden,
                                    llm_emb, fusion_w, fusion_b,
                                    item_emb, item_bias, item_indexes,
                                    tile_n=256, num_splits=2,
                                    return_scores=True)
    # Production-default path: large (auto-capped) tile, loss only.
    loss2 = cpt_crs_recommend(sequence_output, enc_hidden, dec_hidden,
                              llm_emb, fusion_w, fusion_b,
                              item_emb, item_bias, item_indexes)
    jax.block_until_ready((score, loss, loss2))

    # Pure-JAX f32 reference; kernel streams the table in bf16, so tolerances
    # are loose.
    x_ref = jnp.concatenate([sequence_output, enc_hidden, dec_hidden], axis=-1)
    user_ref = x_ref @ fusion_w + fusion_b + llm_emb
    score_ref = user_ref @ item_emb.T + item_bias
    lse_ref = jax.scipy.special.logsumexp(score_ref, axis=-1)
    tgt_ref = score_ref[jnp.arange(B), item_indexes]
    loss_ref = jnp.mean(lse_ref - tgt_ref)

    assert score.shape == (B, ITEM_NUM)
    assert loss.shape == ()
    assert loss2.shape == ()
    assert jnp.allclose(score, score_ref, rtol=5e-2, atol=5e-2), \
        float(jnp.max(jnp.abs(score - score_ref)))
    assert jnp.allclose(loss, loss_ref, rtol=5e-2, atol=5e-2), \
        (float(loss), float(loss_ref))
    assert jnp.allclose(loss2, loss_ref, rtol=5e-2, atol=5e-2), \
        (float(loss2), float(loss_ref))
    print("KERNEL_OK")
</pallas_src>

<mosaic_0001>
module attributes {stable_mosaic.version = 11 : i64} {
  func.func @kernel(%arg0: i32, %arg1: i32, %arg2: memref<8x96xf32, #tpu.memory_space<vmem>>, %arg3: memref<96x300xf32, #tpu.memory_space<vmem>>, %arg4: memref<1x300xf32, #tpu.memory_space<vmem>>, %arg5: memref<8x300xf32, #tpu.memory_space<vmem>>, %arg6: memref<8x1xi32, #tpu.memory_space<vmem>>, %arg7: memref<300x256xbf16, #tpu.memory_space<vmem>>, %arg8: memref<1x256xf32, #tpu.memory_space<vmem>>, %arg9: memref<1x8x1xf32, #tpu.memory_space<vmem>>, %arg10: memref<1x8x1xf32, #tpu.memory_space<vmem>>, %arg11: memref<1x8x1xf32, #tpu.memory_space<vmem>>, %arg12: memref<8x256xf32, #tpu.memory_space<vmem>>, %arg13: memref<8x300xbf16, #tpu.memory_space<vmem>>, %arg14: memref<8x1xf32, #tpu.memory_space<vmem>>, %arg15: memref<8x1xf32, #tpu.memory_space<vmem>>, %arg16: memref<8x1xf32, #tpu.memory_space<vmem>>) attributes {dimension_semantics = [#tpu.dimension_semantics<parallel>, #tpu.dimension_semantics<arbitrary>], iteration_bounds = array<i64: 2, 1>, scalar_prefetch = 0 : i64, scratch_operands = 4 : i64, tpu.core_type = #tpu.core_type<tc>, window_params = [{pipeline_mode = #tpu.pipeline_mode<synchronous>, transform_indices = @transform_0, window_bounds = array<i64: 8, 96>}, {pipeline_mode = #tpu.pipeline_mode<synchronous>, transform_indices = @transform_1, window_bounds = array<i64: 96, 300>}, {pipeline_mode = #tpu.pipeline_mode<synchronous>, transform_indices = @transform_2, window_bounds = array<i64: 1, 300>}, {pipeline_mode = #tpu.pipeline_mode<synchronous>, transform_indices = @transform_3, window_bounds = array<i64: 8, 300>}, {pipeline_mode = #tpu.pipeline_mode<synchronous>, transform_indices = @transform_4, window_bounds = array<i64: 8, 1>}, {transform_indices = @transform_5, window_bounds = array<i64: 300, 256>}, {transform_indices = @transform_6, window_bounds = array<i64: 1, 256>}, {transform_indices = @transform_7, window_bounds = array<i64: 1, 8, 1>}, {transform_indices = @transform_8, window_bounds = array<i64: 1, 8, 1>}, {transform_indices = @transform_9, window_bounds = array<i64: 1, 8, 1>}, {transform_indices = @transform_10, window_bounds = array<i64: 8, 256>}]} {
    %c0_i32 = arith.constant 0 : i32
    %0 = arith.cmpi eq, %arg1, %c0_i32 : i32
    %1 = arith.extui %0 : i1 to i32
    %c0_i32_0 = arith.constant 0 : i32
    %2 = arith.cmpi ne, %1, %c0_i32_0 : i32
    scf.if %2 {
      %c0_30 = arith.constant 0 : index
      %c0_31 = arith.constant 0 : index
      %47 = vector.load %arg2[%c0_30, %c0_31] : memref<8x96xf32, #tpu.memory_space<vmem>>, vector<8x96xf32>
      %c0_32 = arith.constant 0 : index
      %c0_33 = arith.constant 0 : index
      %48 = vector.load %arg3[%c0_32, %c0_33] : memref<96x300xf32, #tpu.memory_space<vmem>>, vector<96x300xf32>
      %cst_34 = arith.constant dense<0.000000e+00> : vector<8x300xf32>
      %49 = tpu.matmul %47, %48, %cst_34 {dimension_numbers = #tpu.dot_dimension_numbers<[1], [0], [0], [1], [0, 0, 1, 1], [], []>} : vector<8x96xf32>, vector<96x300xf32>, vector<8x300xf32> -> vector<8x300xf32>
      %c0_35 = arith.constant 0 : index
      %c0_36 = arith.constant 0 : index
      %50 = vector.load %arg4[%c0_35, %c0_36] : memref<1x300xf32, #tpu.memory_space<vmem>>, vector<1x300xf32>
      %51 = vector.broadcast %50 : vector<1x300xf32> to vector<8x300xf32>
      %52 = arith.addf %49, %51 : vector<8x300xf32>
      %c0_37 = arith.constant 0 : index
      %c0_38 = arith.constant 0 : index
      %53 = vector.load %arg5[%c0_37, %c0_38] : memref<8x300xf32, #tpu.memory_space<vmem>>, vector<8x300xf32>
      %54 = arith.addf %52, %53 : vector<8x300xf32>
      %55 = arith.truncf %54 : vector<8x300xf32> to vector<8x300xbf16>
      %c0_39 = arith.constant 0 : index
      %c0_40 = arith.constant 0 : index
      %56 = vector.load %arg13[%c0_39, %c0_40] : memref<8x300xbf16, #tpu.memory_space<vmem>>, vector<8x300xbf16>
      tpu.vector_store %arg13[%c0_39, %c0_40], %55 {strides = array<i32>} : memref<8x300xbf16, #tpu.memory_space<vmem>>, vector<8x300xbf16>,
      %cst_41 = arith.constant -1.000000e+30 : f32
      %57 = vector.broadcast %cst_41 : f32 to vector<8x1xf32>
      %c0_42 = arith.constant 0 : index
      %c0_43 = arith.constant 0 : index
      %58 = vector.load %arg14[%c0_42, %c0_43] : memref<8x1xf32, #tpu.memory_space<vmem>>, vector<8x1xf32>
      tpu.vector_store %arg14[%c0_42, %c0_43], %57 {strides = array<i32>} : memref<8x1xf32, #tpu.memory_space<vmem>>, vector<8x1xf32>,
      %cst_44 = arith.constant 0.000000e+00 : f32
      %59 = vector.broadcast %cst_44 : f32 to vector<8x1xf32>
      %c0_45 = arith.constant 0 : index
      %c0_46 = arith.constant 0 : index
      %60 = vector.load %arg15[%c0_45, %c0_46] : memref<8x1xf32, #tpu.memory_space<vmem>>, vector<8x1xf32>
      tpu.vector_store %arg15[%c0_45, %c0_46], %59 {strides = array<i32>} : memref<8x1xf32, #tpu.memory_space<vmem>>, vector<8x1xf32>,
      %cst_47 = arith.constant 0.000000e+00 : f32
      %61 = vector.broadcast %cst_47 : f32 to vector<8x1xf32>
      %c0_48 = arith.constant 0 : index
      %c0_49 = arith.constant 0 : index
      %62 = vector.load %arg16[%c0_48, %c0_49] : memref<8x1xf32, #tpu.memory_space<vmem>>, vector<8x1xf32>
      tpu.vector_store %arg16[%c0_48, %c0_49], %61 {strides = array<i32>} : memref<8x1xf32, #tpu.memory_space<vmem>>, vector<8x1xf32>,
    } else {
    }
    %c0 = arith.constant 0 : index
    %c0_1 = arith.constant 0 : index
    %3 = vector.load %arg13[%c0, %c0_1] : memref<8x300xbf16, #tpu.memory_space<vmem>>, vector<8x300xbf16>
    %c0_2 = arith.constant 0 : index
    %c0_3 = arith.constant 0 : index
    %4 = vector.load %arg7[%c0_2, %c0_3] : memref<300x256xbf16, #tpu.memory_space<vmem>>, vector<300x256xbf16>
    %cst = arith.constant dense<0.000000e+00> : vector<8x256xf32>
    %5 = tpu.matmul %3, %4, %cst {dimension_numbers = #tpu.dot_dimension_numbers<[1], [0], [0], [1], [0, 0, 1, 1], [], []>} : vector<8x300xbf16>, vector<300x256xbf16>, vector<8x256xf32> -> vector<8x256xf32>
    %c0_4 = arith.constant 0 : index
    %c0_5 = arith.constant 0 : index
    %6 = vector.load %arg8[%c0_4, %c0_5] : memref<1x256xf32, #tpu.memory_space<vmem>>, vector<1x256xf32>
    %7 = vector.broadcast %6 : vector<1x256xf32> to vector<8x256xf32>
    %8 = arith.addf %5, %7 : vector<8x256xf32>
    %c0_6 = arith.constant 0 : index
    %c0_7 = arith.constant 0 : index
    %9 = vector.load %arg12[%c0_6, %c0_7] : memref<8x256xf32, #tpu.memory_space<vmem>>, vector<8x256xf32>
    tpu.vector_store %arg12[%c0_6, %c0_7], %8 {strides = array<i32>} : memref<8x256xf32, #tpu.memory_space<vmem>>, vector<8x256xf32>,
    %cst_8 = arith.constant dense<0xFF800000> : vector<8xf32>
    %10 = vector.multi_reduction <maximumf>, %8, %cst_8 [1] : vector<8x256xf32> to vector<8xf32>
    %11 = vector.shape_cast %10 : vector<8xf32> to vector<8x1xf32>
    %c0_9 = arith.constant 0 : index
    %c0_10 = arith.constant 0 : index
    %12 = vector.load %arg14[%c0_9, %c0_10] : memref<8x1xf32, #tpu.memory_space<vmem>>, vector<8x1xf32>
    %13 = arith.maximumf %12, %11 : vector<8x1xf32>
    %c0_11 = arith.constant 0 : index
    %c0_12 = arith.constant 0 : index
    %14 = vector.load %arg15[%c0_11, %c0_12] : memref<8x1xf32, #tpu.memory_space<vmem>>, vector<8x1xf32>
    %c0_13 = arith.constant 0 : index
    %c0_14 = arith.constant 0 : index
    %15 = vector.load %arg14[%c0_13, %c0_14] : memref<8x1xf32, #tpu.memory_space<vmem>>, vector<8x1xf32>
    %16 = arith.subf %15, %13 : vector<8x1xf32>
    %17 = math.exp %16 : vector<8x1xf32>
    %18 = arith.mulf %14, %17 : vector<8x1xf32>
    %19 = vector.broadcast %13 : vector<8x1xf32> to vector<8x256xf32>
    %20 = arith.subf %8, %19 : vector<8x256xf32>
    %21 = math.exp %20 : vector<8x256xf32>
    %cst_15 = arith.constant dense<0.000000e+00> : vector<8xf32>
    %22 = vector.multi_reduction <add>, %21, %cst_15 [1] : vector<8x256xf32> to vector<8xf32>
    %23 = vector.shape_cast %22 : vector<8xf32> to vector<8x1xf32>
    %24 = arith.addf %18, %23 : vector<8x1xf32>
    %c0_16 = arith.constant 0 : index
    %c0_17 = arith.constant 0 : index
    %25 = vector.load %arg15[%c0_16, %c0_17] : memref<8x1xf32, #tpu.memory_space<vmem>>, vector<8x1xf32>
    tpu.vector_store %arg15[%c0_16, %c0_17], %24 {strides = array<i32>} : memref<8x1xf32, #tpu.memory_space<vmem>>, vector<8x1xf32>,
    %c0_18 = arith.constant 0 : index
    %c0_19 = arith.constant 0 : index
    %26 = vector.load %arg14[%c0_18, %c0_19] : memref<8x1xf32, #tpu.memory_space<vmem>>, vector<8x1xf32>
    tpu.vector_store %arg14[%c0_18, %c0_19], %13 {strides = array<i32>} : memref<8x1xf32, #tpu.memory_space<vmem>>, vector<8x1xf32>,
    %c1_i32 = arith.constant 1 : i32
    %27 = arith.muli %arg0, %c1_i32 : i32
    %28 = arith.addi %27, %arg1 : i32
    %c256_i32 = arith.constant 256 : i32
    %29 = arith.muli %28, %c256_i32 : i32
    %30 = tpu.iota {dimensions = array<i32: 1>} : vector<1x256xi32>
    %31 = vector.broadcast %29 : i32 to vector<1x256xi32>
    %32 = arith.addi %30, %31 : vector<1x256xi32>
    %c0_20 = arith.constant 0 : index
    %c0_21 = arith.constant 0 : index
    %33 = vector.load %arg6[%c0_20, %c0_21] : memref<8x1xi32, #tpu.memory_space<vmem>>, vector<8x1xi32>
    %34 = vector.broadcast %32 : vector<1x256xi32> to vector<8x256xi32>
    %35 = vector.broadcast %33 : vector<8x1xi32> to vector<8x256xi32>
    %36 = arith.cmpi eq, %34, %35 : vector<8x256xi32>
    %c0_22 = arith.constant 0 : index
    %c0_23 = arith.constant 0 : index
    %37 = vector.load %arg16[%c0_22, %c0_23] : memref<8x1xf32, #tpu.memory_space<vmem>>, vector<8x1xf32>
    %cst_24 = arith.constant 0.000000e+00 : f32
    %38 = vector.broadcast %cst_24 : f32 to vector<8x256xf32>
    %39 = arith.select %36, %8, %38 : vector<8x256xi1>, vector<8x256xf32>
    %cst_25 = arith.constant dense<0.000000e+00> : vector<8xf32>
    %40 = vector.multi_reduction <add>, %39, %cst_25 [1] : vector<8x256xf32> to vector<8xf32>
    %41 = vector.shape_cast %40 : vector<8xf32> to vector<8x1xf32>
    %42 = arith.addf %37, %41 : vector<8x1xf32>
    %c0_26 = arith.constant 0 : index
    %c0_27 = arith.constant 0 : index
    %43 = vector.load %arg16[%c0_26, %c0_27] : memref<8x1xf32, #tpu.memory_space<vmem>>, vector<8x1xf32>
    tpu.vector_store %arg16[%c0_26, %c0_27], %42 {strides = array<i32>} : memref<8x1xf32, #tpu.memory_space<vmem>>, vector<8x1xf32>,
    %c0_i32_28 = arith.constant 0 : i32
    %44 = arith.cmpi eq, %arg1, %c0_i32_28 : i32
    %45 = arith.extui %44 : i1 to i32
    %c0_i32_29 = arith.constant 0 : i32
    %46 = arith.cmpi ne, %45, %c0_i32_29 : i32
    scf.if %46 {
      %c0_30 = arith.constant 0 : index
      %c0_31 = arith.constant 0 : index
      %47 = vector.load %arg14[%c0_30, %c0_31] : memref<8x1xf32, #tpu.memory_space<vmem>>, vector<8x1xf32>
      %c0_32 = arith.constant 0 : index
      %c0_33 = arith.constant 0 : index
      %c0_34 = arith.constant 0 : index
      %48 = vector.load %arg9[%c0_32, %c0_33, %c0_34] : memref<1x8x1xf32, #tpu.memory_space<vmem>>, vector<1x8x1xf32>
      %49 = vector.shape_cast %48 : vector<1x8x1xf32> to vector<8x1xf32>
      %50 = vector.shape_cast %47 : vector<8x1xf32> to vector<1x8x1xf32>
      tpu.vector_store %arg9[%c0_32, %c0_33, %c0_34], %50 {strides = array<i32>} : memref<1x8x1xf32, #tpu.memory_space<vmem>>, vector<1x8x1xf32>,
      %c0_35 = arith.constant 0 : index
      %c0_36 = arith.constant 0 : index
      %51 = vector.load %arg15[%c0_35, %c0_36] : memref<8x1xf32, #tpu.memory_space<vmem>>, vector<8x1xf32>
      %c0_37 = arith.constant 0 : index
      %c0_38 = arith.constant 0 : index
      %c0_39 = arith.constant 0 : index
      %52 = vector.load %arg10[%c0_37, %c0_38, %c0_39] : memref<1x8x1xf32, #tpu.memory_space<vmem>>, vector<1x8x1xf32>
      %53 = vector.shape_cast %52 : vector<1x8x1xf32> to vector<8x1xf32>
      %54 = vector.shape_cast %51 : vector<8x1xf32> to vector<1x8x1xf32>
      tpu.vector_store %arg10[%c0_37, %c0_38, %c0_39], %54 {strides = array<i32>} : memref<1x8x1xf32, #tpu.memory_space<vmem>>, vector<1x8x1xf32>,
      %c0_40 = arith.constant 0 : index
      %c0_41 = arith.constant 0 : index
      %55 = vector.load %arg16[%c0_40, %c0_41] : memref<8x1xf32, #tpu.memory_space<vmem>>, vector<8x1xf32>
      %c0_42 = arith.constant 0 : index
      %c0_43 = arith.constant 0 : index
      %c0_44 = arith.constant 0 : index
      %56 = vector.load %arg11[%c0_42, %c0_43, %c0_44] : memref<1x8x1xf32, #tpu.memory_space<vmem>>, vector<1x8x1xf32>
      %57 = vector.shape_cast %56 : vector<1x8x1xf32> to vector<8x1xf32>
      %58 = vector.shape_cast %55 : vector<8x1xf32> to vector<1x8x1xf32>
      tpu.vector_store %arg11[%c0_42, %c0_43, %c0_44], %58 {strides = array<i32>} : memref<1x8x1xf32, #tpu.memory_space<vmem>>, vector<1x8x1xf32>,
    } else {
    }
    return
  }
  func.func @transform_0(%arg0: i32, %arg1: i32) -> (i32, i32) {
    %c0_i32 = arith.constant 0 : i32
    %c0_i32_0 = arith.constant 0 : i32
    %c0_i32_1 = arith.constant 0 : i32
    return %c0_i32, %c0_i32_0 : i32, i32
  }
  func.func @transform_1(%arg0: i32, %arg1: i32) -> (i32, i32) {
    %c0_i32 = arith.constant 0 : i32
    %c0_i32_0 = arith.constant 0 : i32
    %c0_i32_1 = arith.constant 0 : i32
    return %c0_i32, %c0_i32_0 : i32, i32
  }
  func.func @transform_2(%arg0: i32, %arg1: i32) -> (i32, i32) {
    %c0_i32 = arith.constant 0 : i32
    %c0_i32_0 = arith.constant 0 : i32
    %c0_i32_1 = arith.constant 0 : i32
    return %c0_i32, %c0_i32_0 : i32, i32
  }
  func.func @transform_3(%arg0: i32, %arg1: i32) -> (i32, i32) {
    %c0_i32 = arith.constant 0 : i32
    %c0_i32_0 = arith.constant 0 : i32
    %c0_i32_1 = arith.constant 0 : i32
    return %c0_i32, %c0_i32_0 : i32, i32
  }
  func.func @transform_4(%arg0: i32, %arg1: i32) -> (i32, i32) {
    %c0_i32 = arith.constant 0 : i32
    %c0_i32_0 = arith.constant 0 : i32
    %c0_i32_1 = arith.constant 0 : i32
    return %c0_i32, %c0_i32_0 : i32, i32
  }
  func.func @transform_5(%arg0: i32, %arg1: i32) -> (i32, i32) {
    %c1_i32 = arith.constant 1 : i32
    %0 = arith.muli %arg0, %c1_i32 : i32
    %1 = arith.addi %0, %arg1 : i32
    %c0_i32 = arith.constant 0 : i32
    %c0_i32_0 = arith.constant 0 : i32
    return %c0_i32, %1 : i32, i32
  }
  func.func @transform_6(%arg0: i32, %arg1: i32) -> (i32, i32) {
    %c1_i32 = arith.constant 1 : i32
    %0 = arith.muli %arg0, %c1_i32 : i32
    %1 = arith.addi %0, %arg1 : i32
    %c0_i32 = arith.constant 0 : i32
    %c0_i32_0 = arith.constant 0 : i32
    return %c0_i32, %1 : i32, i32
  }
  func.func @transform_7(%arg0: i32, %arg1: i32) -> (i32, i32, i32) {
    %c0_i32 = arith.constant 0 : i32
    %c0_i32_0 = arith.constant 0 : i32
    %c0_i32_1 = arith.constant 0 : i32
    return %arg0, %c0_i32, %c0_i32_0 : i32, i32, i32
  }
  func.func @transform_8(%arg0: i32, %arg1: i32) -> (i32, i32, i32) {
    %c0_i32 = arith.constant 0 : i32
    %c0_i32_0 = arith.constant 0 : i32
    %c0_i32_1 = arith.constant 0 : i32
    return %arg0, %c0_i32, %c0_i32_0 : i32, i32, i32
  }
  func.func @transform_9(%arg0: i32, %arg1: i32) -> (i32, i32, i32) {
    %c0_i32 = arith.constant 0 : i32
    %c0_i32_0 = arith.constant 0 : i32
    %c0_i32_1 = arith.constant 0 : i32
    return %arg0, %c0_i32, %c0_i32_0 : i32, i32, i32
  }
  func.func @transform_10(%arg0: i32, %arg1: i32) -> (i32, i32) {
    %c1_i32 = arith.constant 1 : i32
    %0 = arith.muli %arg0, %c1_i32 : i32
    %1 = arith.addi %0, %arg1 : i32
    %c0_i32 = arith.constant 0 : i32
    %c0_i32_0 = arith.constant 0 : i32
    return %c0_i32, %1 : i32, i32
  }
}

</mosaic_0001>

<llo_original>
// kernel: tpu_custom_call.1
$region0: #{tpu_custom_call.1}
  #allocation0 [shape = 'u32[]', space=smem, size = 0x4, offset = 0x4, fixed_abs, tag = 'smem constant byte address 0x4 - core index']
  #allocation1 [shape = 'u32[72,128]{1,0:T(1,128)}', space=vmem, size = 0x9000, scoped, tag = 'internal scratch']
  #allocation2 [shape = 'bf16[8,300]{1,0:T(8,128)(2,1)}', space=vmem, size = 0x1800, scoped, tag = 'scratch operand']
  #allocation3 [shape = 'f32[8,1]{1,0:T(8,128)}', space=vmem, size = 0x1000, scoped, tag = 'scratch operand']
  #allocation4 [shape = 'f32[8,1]{1,0:T(8,128)}', space=vmem, size = 0x1000, scoped, tag = 'scratch operand']
  #allocation5 [shape = 'f32[8,1]{1,0:T(8,128)}', space=vmem, size = 0x1000, scoped, tag = 'scratch operand']
  %s0 = inlined_call_operand.vmem [shape: f32[8,96], index: 0, kind: input, shape index: {}]
  %s1 = inlined_call_operand.hbm [shape: f32[96,300], index: 1, kind: input, shape index: {}]
  %s2 = inlined_call_operand.hbm [shape: f32[1,300], index: 2, kind: input, shape index: {}]
  %s3 = inlined_call_operand.hbm [shape: f32[8,300], index: 3, kind: input, shape index: {}]
  %s4 = inlined_call_operand.vmem [shape: s32[8,1], index: 4, kind: input, shape index: {}]
  %s5 = inlined_call_operand.hbm [shape: bf16[300,512], index: 5, kind: input, shape index: {}]
  %s6 = inlined_call_operand.vmem [shape: f32[1,512], index: 6, kind: input, shape index: {}]
  %s7 = inlined_call_operand.vmem [shape: f32[2,8,1], index: 7, kind: output, shape index: {0}]
  %s8 = inlined_call_operand.vmem [shape: f32[2,8,1], index: 8, kind: output, shape index: {1}]
  %s9 = inlined_call_operand.vmem [shape: f32[2,8,1], index: 9, kind: output, shape index: {2}]
  %s10 = inlined_call_operand.hbm [shape: f32[8,512], index: 10, kind: output, shape index: {3}]
  %11 = xla_tuple %s7, %s8, %s9, %s10
  %s12 = sld [smem:[#allocation0]]
  $region109: #{tpu_custom_call.1} parent=0
    _
  %s14 = ssub.s32 1, %s12
  %s15 = scalar_select 0, %s14, %s12
  $region1: #{tpu_custom_call.1} parent=0
    #allocation6 [shape = 'u8[147456]{0}', space=vmem, size = 0x24000, scoped, tag = 'input window, operand 1, single buffered']
    #allocation7 [shape = 's32[2]{0}', space=sflag, size = 0x8, scoped, tag = 'scoped memory for tpu_custom_call.1']
    #allocation8 [shape = 's32[2]{0}', space=sflag, size = 0x8, scoped, tag = 'scoped memory for tpu_custom_call.1']
    #allocation9 [shape = 'u8[1536]{0}', space=vmem, size = 0x800, scoped, tag = 'input window, operand 2, single buffered']
    #allocation10 [shape = 's32[1]{0}', space=sflag, size = 0x4, scoped, tag = 'scoped memory for tpu_custom_call.1']
    #allocation11 [shape = 'u8[12288]{0}', space=vmem, size = 0x3000, scoped, tag = 'input window, operand 3, single buffered']
    #allocation12 [shape = 'u8[311296]{0}', space=vmem, size = 0x4c000, scoped, tag = 'input window, operand 5']
    #allocation13 [shape = 's32[2]{0}', space=sflag, size = 0x8, scoped, tag = 'scoped memory for tpu_custom_call.1']
    #allocation14 [shape = 'u8[16384]{0}', space=vmem, size = 0x4000, scoped, tag = 'output window, operand 3']
    %16 = vsyncpa [#allocation7], 0
    %17 = vsyncpa [#allocation10], 0
    %18 = vsyncpa [#allocation13], 0
    %s19 = scalar_lea.sflag [#allocation13], 1
    %20 = vsyncpa %s19, 0
    %21 = vsyncpa [#allocation8], 0
    %s22 = scalar_lea.sflag [#allocation8], 1
    %23 = vsyncpa %s22, 0
    loop: start=0, step=1, limit=4
    $region2: #{tpu_custom_call.1} parent=1 // loop_pre_header
      _
    $region3: #{tpu_custom_call.1} parent=1 // loop_header
      %s25 = sphi 0, %s29
      %p26 = scmp.ge.s32.totalorder %s25, 4
      %s32 = sphi 0, %s44
      %s33 = sphi 0, %s40
      %s34 = sphi 0, %s32
      %s35 = sphi 0, %s33
      %s36 = sphi 0, %s34
      %s37 = sphi 0, %s35
      %s45 = sphi 0, %s45
      %s47 = sphi 0, %s45
      %s48 = sphi 0, %s47
      %s62 = sphi 0, %s48
      %s66 = sphi 0, %s66
      %s68 = sphi 0, %s66
      %s69 = sphi 0, %s68
      %s83 = sphi 0, %s69
      %s87 = sphi 0, %s87
      %s89 = sphi 0, %s87
      %s90 = sphi 0, %s89
      %s104 = sphi 0, %s90
      %s108 = sphi 0, %s108
      %s110 = sphi 0, %s108
      %s111 = sphi 0, %s110
      %s125 = sphi 0, %s111
      %s129 = sphi 0, %s129
      %s131 = sphi 0, %s129
      %s132 = sphi 0, %s131
      %s146 = sphi 0, %s132
      %s154 = sphi 0, %s156
      %s157 = sphi 0, %s154
      %s158 = sphi 0, %s157
      %s174 = sphi 0, %s158
      %s182 = sphi 0, %s184
      %s185 = sphi 0, %s182
      %s186 = sphi 0, %s185
      %s202 = sphi 0, %s186
      %s208 = sphi 0, %s210
      %s211 = sphi 0, %s208
      %s212 = sphi 0, %s211
      %s228 = sphi 0, %s212
      %s234 = sphi 0, %s236
      %s237 = sphi 0, %s234
      %s238 = sphi 0, %s237
      %s254 = sphi 0, %s238
      %s260 = sphi 0, %s262
      %s263 = sphi 0, %s260
      %s264 = sphi 0, %s263
      %s280 = sphi 0, %s264
      %s288 = sphi 0, %s290
      %s291 = sphi 0, %s288
      %s292 = sphi 0, %s291
      %s308 = sphi 0, %s292
    $region4: #{tpu_custom_call.1} parent=1 // loop_header_branch
      %28 = sbr.rel (%p26) target = $region8
    $region5: #{tpu_custom_call.1} parent=1 // loop_body
      %s30 = ssub.s32 %s25, 1
      %s31 = ssub.s32 %s25, 2
      %s38 = sadd.s32 1, %s33
      %p39 = scmp.ge.s32.totalorder %s38, 1
      %s40 = scalar_select %p39, 0, %s38
      %s41 = sadd.s32 1, %s32
      %s42 = scalar_select %p39, %s41, %s32
      %p43 = scmp.ge.s32.totalorder %s42, 2
      %s44 = scalar_select %p43, 0, %s42
      %s46 = sadd.s32 %s45, 1
      %p49 = scmp.eq.s32.totalorder %s25, 1
      %p50 = scmp.ne.s32.totalorder %s45, %s47
      %p51 = scmp.eq.s32.totalorder %s25, 0
      %p52 = por %p50, %p51
      %p53 = scmp.ne.s32.totalorder %s45, %s47
      %p54 = scmp.eq.s32.totalorder %s30, 1
      %p55 = por %p53, %p54
      %p56 = scmp.ne.s32.totalorder %s47, %s48
      %p57 = scmp.eq.s32.totalorder %s30, 0
      %p58 = por %p56, %p57
      %p59 = scmp.ne.s32.totalorder %s47, %s48
      %p60 = scmp.eq.s32.totalorder %s31, 1
      %p61 = por %p59, %p60
      %p63 = scmp.ne.s32.totalorder %s48, %s62
      %p64 = scmp.eq.s32.totalorder %s31, 0
      %p65 = por %p63, %p64
      %s67 = sadd.s32 %s66, 1
      %p70 = scmp.eq.s32.totalorder %s25, 1
      %p71 = scmp.ne.s32.totalorder %s66, %s68
      %p72 = scmp.eq.s32.totalorder %s25, 0
      %p73 = por %p71, %p72
      %p74 = scmp.ne.s32.totalorder %s66, %s68
      %p75 = scmp.eq.s32.totalorder %s30, 1
      %p76 = por %p74, %p75
      %p77 = scmp.ne.s32.totalorder %s68, %s69
      %p78 = scmp.eq.s32.totalorder %s30, 0
      %p79 = por %p77, %p78
      %p80 = scmp.ne.s32.totalorder %s68, %s69
      %p81 = scmp.eq.s32.totalorder %s31, 1
      %p82 = por %p80, %p81
      %p84 = scmp.ne.s32.totalorder %s69, %s83
      %p85 = scmp.eq.s32.totalorder %s31, 0
      %p86 = por %p84, %p85
      %s88 = sadd.s32 %s87, 1
      %p91 = scmp.eq.s32.totalorder %s25, 1
      %p92 = scmp.ne.s32.totalorder %s87, %s89
      %p93 = scmp.eq.s32.totalorder %s25, 0
      %p94 = por %p92, %p93
      %p95 = scmp.ne.s32.totalorder %s87, %s89
      %p96 = scmp.eq.s32.totalorder %s30, 1
      %p97 = por %p95, %p96
      %p98 = scmp.ne.s32.totalorder %s89, %s90
      %p99 = scmp.eq.s32.totalorder %s30, 0
      %p100 = por %p98, %p99
      %p101 = scmp.ne.s32.totalorder %s89, %s90
      %p102 = scmp.eq.s32.totalorder %s31, 1
      %p103 = por %p101, %p102
      %p105 = scmp.ne.s32.totalorder %s90, %s104
      %p106 = scmp.eq.s32.totalorder %s31, 0
      %p107 = por %p105, %p106
      %s109 = sadd.s32 %s108, 1
      %p112 = scmp.eq.s32.totalorder %s25, 1
      %p113 = scmp.ne.s32.totalorder %s108, %s110
      %p114 = scmp.eq.s32.totalorder %s25, 0
      %p115 = por %p113, %p114
      %p116 = scmp.ne.s32.totalorder %s108, %s110
      %p117 = scmp.eq.s32.totalorder %s30, 1
      %p118 = por %p116, %p117
      %p119 = scmp.ne.s32.totalorder %s110, %s111
      %p120 = scmp.eq.s32.totalorder %s30, 0
      %p121 = por %p119, %p120
      %p122 = scmp.ne.s32.totalorder %s110, %s111
      %p123 = scmp.eq.s32.totalorder %s31, 1
      %p124 = por %p122, %p123
      %p126 = scmp.ne.s32.totalorder %s111, %s125
      %p127 = scmp.eq.s32.totalorder %s31, 0
      %p128 = por %p126, %p127
      %s130 = sadd.s32 %s129, 1
      %p133 = scmp.eq.s32.totalorder %s25, 1
      %p134 = scmp.ne.s32.totalorder %s129, %s131
      %p135 = scmp.eq.s32.totalorder %s25, 0
      %p136 = por %p134, %p135
      %p137 = scmp.ne.s32.totalorder %s129, %s131
      %p138 = scmp.eq.s32.totalorder %s30, 1
      %p139 = por %p137, %p138
      %p140 = scmp.ne.s32.totalorder %s131, %s132
      %p141 = scmp.eq.s32.totalorder %s30, 0
      %p142 = por %p140, %p141
      %p143 = scmp.ne.s32.totalorder %s131, %s132
      %p144 = scmp.eq.s32.totalorder %s31, 1
      %p145 = por %p143, %p144
      %p147 = scmp.ne.s32.totalorder %s132, %s146
      %p148 = scmp.eq.s32.totalorder %s31, 0
      %p149 = por %p147, %p148
      %s150 = sadd.s32 %s32, %s33
      %s151 = sadd.s32 %s44, %s40
      %s152 = ssub.s32 %s150, %s151
      %p153 = scmp.eq.s32.totalorder %s152, 0
      %s155 = sadd.s32 %s154, 1
      %s156 = scalar_select %p153, %s154, %s155
      %p159 = pneg %p153
      %p160 = scmp.eq.s32.totalorder %s25, 1
      %p161 = por %p159, %p160
      %p162 = scmp.ne.s32.totalorder %s154, %s157
      %p163 = scmp.eq.s32.totalorder %s25, 0
      %p164 = por %p162, %p163
      %p165 = scmp.ne.s32.totalorder %s154, %s157
      %p166 = scmp.eq.s32.totalorder %s30, 1
      %p167 = por %p165, %p166
      %p168 = scmp.ne.s32.totalorder %s157, %s158
      %p169 = scmp.eq.s32.totalorder %s30, 0
      %p170 = por %p168, %p169
      %p171 = scmp.ne.s32.totalorder %s157, %s158
      %p172 = scmp.eq.s32.totalorder %s31, 1
      %p173 = por %p171, %p172
      %p175 = scmp.ne.s32.totalorder %s158, %s174
      %p176 = scmp.eq.s32.totalorder %s31, 0
      %p177 = por %p175, %p176
      %s178 = sadd.s32 %s32, %s33
      %s179 = sadd.s32 %s44, %s40
      %s180 = ssub.s32 %s178, %s179
      %p181 = scmp.eq.s32.totalorder %s180, 0
      %s183 = sadd.s32 %s182, 1
      %s184 = scalar_select %p181, %s182, %s183
      %p187 = pneg %p181
      %p188 = scmp.eq.s32.totalorder %s25, 1
      %p189 = por %p187, %p188
      %p190 = scmp.ne.s32.totalorder %s182, %s185
      %p191 = scmp.eq.s32.totalorder %s25, 0
      %p192 = por %p190, %p191
      %p193 = scmp.ne.s32.totalorder %s182, %s185
      %p194 = scmp.eq.s32.totalorder %s30, 1
      %p195 = por %p193, %p194
      %p196 = scmp.ne.s32.totalorder %s185, %s186
      %p197 = scmp.eq.s32.totalorder %s30, 0
      %p198 = por %p196, %p197
      %p199 = scmp.ne.s32.totalorder %s185, %s186
      %p200 = scmp.eq.s32.totalorder %s31, 1
      %p201 = por %p199, %p200
      %p203 = scmp.ne.s32.totalorder %s186, %s202
      %p204 = scmp.eq.s32.totalorder %s31, 0
      %p205 = por %p203, %p204
      %s206 = ssub.s32 %s32, %s44
      %p207 = scmp.eq.s32.totalorder %s206, 0
      %s209 = sadd.s32 %s208, 1
      %s210 = scalar_select %p207, %s208, %s209
      %p213 = pneg %p207
      %p214 = scmp.eq.s32.totalorder %s25, 1
      %p215 = por %p213, %p214
      %p216 = scmp.ne.s32.totalorder %s208, %s211
      %p217 = scmp.eq.s32.totalorder %s25, 0
      %p218 = por %p216, %p217
      %p219 = scmp.ne.s32.totalorder %s208, %s211
      %p220 = scmp.eq.s32.totalorder %s30, 1
      %p221 = por %p219, %p220
      %p222 = scmp.ne.s32.totalorder %s211, %s212
      %p223 = scmp.eq.s32.totalorder %s30, 0
      %p224 = por %p222, %p223
      %p225 = scmp.ne.s32.totalorder %s211, %s212
      %p226 = scmp.eq.s32.totalorder %s31, 1
      %p227 = por %p225, %p226
      %p229 = scmp.ne.s32.totalorder %s212, %s228
      %p230 = scmp.eq.s32.totalorder %s31, 0
      %p231 = por %p229, %p230
      %s232 = ssub.s32 %s32, %s44
      %p233 = scmp.eq.s32.totalorder %s232, 0
      %s235 = sadd.s32 %s234, 1
      %s236 = scalar_select %p233, %s234, %s235
      %p239 = pneg %p233
      %p240 = scmp.eq.s32.totalorder %s25, 1
      %p241 = por %p239, %p240
      %p242 = scmp.ne.s32.totalorder %s234, %s237
      %p243 = scmp.eq.s32.totalorder %s25, 0
      %p244 = por %p242, %p243
      %p245 = scmp.ne.s32.totalorder %s234, %s237
      %p246 = scmp.eq.s32.totalorder %s30, 1
      %p247 = por %p245, %p246
      %p248 = scmp.ne.s32.totalorder %s237, %s238
      %p249 = scmp.eq.s32.totalorder %s30, 0
      %p250 = por %p248, %p249
      %p251 = scmp.ne.s32.totalorder %s237, %s238
      %p252 = scmp.eq.s32.totalorder %s31, 1
      %p253 = por %p251, %p252
      %p255 = scmp.ne.s32.totalorder %s238, %s254
      %p256 = scmp.eq.s32.totalorder %s31, 0
      %p257 = por %p255, %p256
      %s258 = ssub.s32 %s32, %s44
      %p259 = scmp.eq.s32.totalorder %s258, 0
      %s261 = sadd.s32 %s260, 1
      %s262 = scalar_select %p259, %s260, %s261
      %p265 = pneg %p259
      %p266 = scmp.eq.s32.totalorder %s25, 1
      %p267 = por %p265, %p266
      %p268 = scmp.ne.s32.totalorder %s260, %s263
      %p269 = scmp.eq.s32.totalorder %s25, 0
      %p270 = por %p268, %p269
      %p271 = scmp.ne.s32.totalorder %s260, %s263
      %p272 = scmp.eq.s32.totalorder %s30, 1
      %p273 = por %p271, %p272
      %p274 = scmp.ne.s32.totalorder %s263, %s264
      %p275 = scmp.eq.s32.totalorder %s30, 0
      %p276 = por %p274, %p275
      %p277 = scmp.ne.s32.totalorder %s263, %s264
      %p278 = scmp.eq.s32.totalorder %s31, 1
      %p279 = por %p277, %p278
      %p281 = scmp.ne.s32.totalorder %s264, %s280
      %p282 = scmp.eq.s32.totalorder %s31, 0
      %p283 = por %p281, %p282
      %s284 = sadd.s32 %s32, %s33
      %s285 = sadd.s32 %s44, %s40
      %s286 = ssub.s32 %s284, %s285
      %p287 = scmp.eq.s32.totalorder %s286, 0
      %s289 = sadd.s32 %s288, 1
      %s290 = scalar_select %p287, %s288, %s289
      %p293 = pneg %p287
      %p294 = scmp.eq.s32.totalorder %s25, 1
      %p295 = por %p293, %p294
      %p296 = scmp.ne.s32.totalorder %s288, %s291
      %p297 = scmp.eq.s32.totalorder %s25, 0
      %p298 = por %p296, %p297
      %p299 = scmp.ne.s32.totalorder %s288, %s291
      %p300 = scmp.eq.s32.totalorder %s30, 1
      %p301 = por %p299, %p300
      %p302 = scmp.ne.s32.totalorder %s291, %s292
      %p303 = scmp.eq.s32.totalorder %s30, 0
      %p304 = por %p302, %p303
      %p305 = scmp.ne.s32.totalorder %s291, %s292
      %p306 = scmp.eq.s32.totalorder %s31, 1
      %p307 = por %p305, %p306
      %p309 = scmp.ne.s32.totalorder %s292, %s308
      %p310 = scmp.eq.s32.totalorder %s31, 0
      %p311 = por %p309, %p310
      %p312 = scmp.le.s32.totalorder 1, %s25
      %p313 = scmp.lt.s32.totalorder %s25, 3
      %p314 = pnand %p312, %p313
      %p315 = pneg %p314
      // Predicated region
      $region9: #{tpu_custom_call.1} parent=5 // pred_check
        _
      $region10: #{tpu_custom_call.1} parent=5 // pred_check_branch
        %317 = sbr.rel (%p314) target = $region12
      $region11: #{tpu_custom_call.1} parent=5 // pred_region
        %s318 = ssub.s32 %s25, 1
        // Predicated region
        $region13: #{tpu_custom_call.1} parent=11 // pred_check
          %p319 = pneg %p58
        $region14: #{tpu_custom_call.1} parent=11 // pred_check_branch
          %321 = sbr.rel (%p319) target = $region16
        $region15: #{tpu_custom_call.1} parent=11 // pred_region
          _
        $region16: #{tpu_custom_call.1} parent=11 // pred_fallthru
          _
        // Predicated region
        $region17: #{tpu_custom_call.1} parent=11 // pred_check
          %p322 = pneg %p79
        $region18: #{tpu_custom_call.1} parent=11 // pred_check_branch
          %324 = sbr.rel (%p322) target = $region20
        $region19: #{tpu_custom_call.1} parent=11 // pred_region
          %326 = vsyncadd [#allocation7], 0
          %s327 = sshll.u32 %s1, 4
          %s328 = int_to_ptr.hbm [resolvable:$true] %s327
          %s329 = sshll.u32 [#allocation6], 4
          %s330 = int_to_ptr.vmem [resolvable:$true] %s329
          %335 = dma.hbm_to_vmem [thread:$0]  %s328, 4608, %s330, [#allocation7], 384, 384, 24
        $region20: #{tpu_custom_call.1} parent=11 // pred_fallthru
          _
        // Predicated region
        $region21: #{tpu_custom_call.1} parent=11 // pred_check
          %p336 = pneg %p100
        $region22: #{tpu_custom_call.1} parent=11 // pred_check_branch
          %338 = sbr.rel (%p336) target = $region24
        $region23: #{tpu_custom_call.1} parent=11 // pred_region
          %340 = vsyncadd [#allocation10], 0
          %s342 = sshll.u32 %s2, 4
          %s343 = int_to_ptr.hbm [resolvable:$true] %s342
          %s344 = sshll.u32 [#allocation9], 4
          %s345 = int_to_ptr.vmem [resolvable:$true] %s344
          %347 = dma.hbm_to_vmem [thread:$0]  %s343, 48, %s345, [#allocation10]
        $region24: #{tpu_custom_call.1} parent=11 // pred_fallthru
          _
        // Predicated region
        $region25: #{tpu_custom_call.1} parent=11 // pred_check
          %p348 = pneg %p121
        $region26: #{tpu_custom_call.1} parent=11 // pred_check_branch
          %350 = sbr.rel (%p348) target = $region28
        $region27: #{tpu_custom_call.1} parent=11 // pred_region
          %352 = vsyncadd [#allocation10], 0
          %s354 = sshll.u32 %s3, 4
          %s355 = int_to_ptr.hbm [resolvable:$true] %s354
          %s356 = sshll.u32 [#allocation11], 4
          %s357 = int_to_ptr.vmem [resolvable:$true] %s356
          %359 = dma.hbm_to_vmem [thread:$0]  %s355, 384, %s357, [#allocation10]
        $region28: #{tpu_custom_call.1} parent=11 // pred_fallthru
          _
        // Predicated region
        $region29: #{tpu_custom_call.1} parent=11 // pred_check
          %p360 = pneg %p142
        $region30: #{tpu_custom_call.1} parent=11 // pred_check_branch
          %362 = sbr.rel (%p360) target = $region32
        $region31: #{tpu_custom_call.1} parent=11 // pred_region
          _
        $region32: #{tpu_custom_call.1} parent=11 // pred_fallthru
          _
      $region12: #{tpu_custom_call.1} parent=5 // pred_fallthru
        _
      %p363 = scmp.lt.s32.totalorder %s25, 2
      // Predicated region
      $region33: #{tpu_custom_call.1} parent=5 // pred_check
        %p364 = pneg %p363
      $region34: #{tpu_custom_call.1} parent=5 // pred_check_branch
        %366 = sbr.rel (%p364) target = $region36
      $region35: #{tpu_custom_call.1} parent=5 // pred_region
        // Predicated region
        $region37: #{tpu_custom_call.1} parent=35 // pred_check
          %p367 = pneg %p164
        $region38: #{tpu_custom_call.1} parent=35 // pred_check_branch
          %369 = sbr.rel (%p367) target = $region40
        $region39: #{tpu_custom_call.1} parent=35 // pred_region
          %s370 = sand.u32 %s154, 1
          %s371 = scalar_lea.sflag [#allocation13], %s370
          %s372 = sand.u32 %s154, 1
          %s373 = smul.addr %s372, 304
          %s374 = scalar_lea.vmem [#allocation12], %s373
          %s375 = sadd.s32 %s32, %s33
          %s376 = smul.u32 2, %s375
          %378 = vsyncadd %s371, 0
          %s379 = smul.addr %s376, 4
          %s380 = scalar_lea.hbm %s5, %s379
          %s381 = sshll.u32 %s380, 4
          %s382 = int_to_ptr.hbm [resolvable:$true] %s381
          %s383 = sshll.u32 %s374, 4
          %s384 = int_to_ptr.vmem [resolvable:$true] %s383
          %389 = dma.hbm_to_vmem [thread:$0]  %s382, 4864, %s384, %s371, 256, 128, 8
        $region40: #{tpu_custom_call.1} parent=35 // pred_fallthru
          _
        // Predicated region
        $region41: #{tpu_custom_call.1} parent=35 // pred_check
          %p390 = pneg %p192
        $region42: #{tpu_custom_call.1} parent=35 // pred_check_branch
          %392 = sbr.rel (%p390) target = $region44
        $region43: #{tpu_custom_call.1} parent=35 // pred_region
          %s393 = sadd.s32 %s32, %s33
          %s394 = smul.u32 2, %s393
          %p395 = scmp.lt.s32.totalorder %s394, 3
          %s396 = scalar_select %p395, %s394, 3
          %s397 = scalar_lea.vmem %s6, %s396
          %s398 = sadd.s32 %s32, %s33
          %s399 = smul.u32 2, %s398
        $region44: #{tpu_custom_call.1} parent=35 // pred_fallthru
          _
      $region36: #{tpu_custom_call.1} parent=5 // pred_fallthru
        _
      %p400 = scmp.le.s32.totalorder 1, %s25
      %p401 = scmp.lt.s32.totalorder %s25, 3
      %p402 = pnand %p400, %p401
      %p403 = pneg %p402
      // Predicated region
      $region45: #{tpu_custom_call.1} parent=5 // pred_check
        _
      $region46: #{tpu_custom_call.1} parent=5 // pred_check_branch
        %405 = sbr.rel (%p402) target = $region48
      $region47: #{tpu_custom_call.1} parent=5 // pred_region
        %s406 = ssub.s32 %s25, 1
        // Predicated region
        $region49: #{tpu_custom_call.1} parent=47 // pred_check
          %p407 = pneg %p79
        $region50: #{tpu_custom_call.1} parent=47 // pred_check_branch
          %409 = sbr.rel (%p407) target = $region52
        $region51: #{tpu_custom_call.1} parent=47 // pred_region
          %411 = dma.done [#allocation7], 4608
        $region52: #{tpu_custom_call.1} parent=47 // pred_fallthru
          _
        // Predicated region
        $region53: #{tpu_custom_call.1} parent=47 // pred_check
          %p412 = pneg %p100
        $region54: #{tpu_custom_call.1} parent=47 // pred_check_branch
          %414 = sbr.rel (%p412) target = $region56
        $region55: #{tpu_custom_call.1} parent=47 // pred_region
          %416 = dma.done [#allocation10], 48
        $region56: #{tpu_custom_call.1} parent=47 // pred_fallthru
          _
        // Predicated region
        $region57: #{tpu_custom_call.1} parent=47 // pred_check
          %p417 = pneg %p121
        $region58: #{tpu_custom_call.1} parent=47 // pred_check_branch
          %419 = sbr.rel (%p417) target = $region60
        $region59: #{tpu_custom_call.1} parent=47 // pred_region
          %421 = dma.done [#allocation10], 384
        $region60: #{tpu_custom_call.1} parent=47 // pred_fallthru
          _
        %s422 = sand.u32 %s157, 1
        %s423 = scalar_lea.sflag [#allocation13], %s422
        %s424 = sand.u32 %s157, 1
        %s425 = smul.addr %s424, 304
        %s426 = scalar_lea.vmem [#allocation12], %s425
        // Predicated region
        $region61: #{tpu_custom_call.1} parent=47 // pred_check
          %p427 = pneg %p170
        $region62: #{tpu_custom_call.1} parent=47 // pred_check_branch
          %429 = sbr.rel (%p427) target = $region64
        $region63: #{tpu_custom_call.1} parent=47 // pred_region
          %431 = dma.done %s423, 4864
        $region64: #{tpu_custom_call.1} parent=47 // pred_fallthru
          _
        %p432 = pneg %p58
        %p433 = pneg %p55
        %p434 = pneg %p79
        %p435 = pneg %p76
        %p436 = pneg %p100
        %p437 = pneg %p97
        %p438 = pneg %p121
        %p439 = pneg %p118
        %p440 = pneg %p142
        %p441 = pneg %p139
        %s442 = sand.u32 %s157, 1
        %s443 = scalar_lea.sflag [#allocation13], %s442
        %s444 = sand.u32 %s157, 1
        %s445 = smul.addr %s444, 304
        %s446 = scalar_lea.vmem [#allocation12], %s445
        %p447 = pneg %p170
        %p448 = pneg %p167
        %s449 = sadd.s32 %s34, %s35
        %s450 = smul.u32 2, %s449
        %p451 = scmp.lt.s32.totalorder %s450, 3
        %s452 = scalar_select %p451, %s450, 3
        %s453 = scalar_lea.vmem %s6, %s452
        %p454 = pneg %p198
        %p455 = pneg %p195
        %p456 = pneg %p224
        %p457 = pneg %p221
        %p458 = scmp.lt.s32.totalorder %s34, 1
        %s459 = scalar_select %p458, %s34, 1
        %s460 = smul.addr %s459, 8
        %s461 = scalar_lea.vmem %s7, %s460
        %p462 = pneg %p250
        %p463 = pneg %p247
        %p464 = scmp.lt.s32.totalorder %s34, 1
        %s465 = scalar_select %p464, %s34, 1
        %s466 = smul.addr %s465, 8
        %s467 = scalar_lea.vmem %s8, %s466
        %p468 = pneg %p276
        %p469 = pneg %p273
        %p470 = scmp.lt.s32.totalorder %s34, 1
        %s471 = scalar_select %p470, %s34, 1
        %s472 = smul.addr %s471, 8
        %s473 = scalar_lea.vmem %s9, %s472
        %p474 = pneg %p304
        %p475 = pneg %p301
        %s476 = sand.u32 %s291, 1
        %s477 = scalar_lea.sflag [#allocation8], %s476
        %s478 = sand.u32 %s291, 1
        %s479 = smul.addr %s478, 16
        %s480 = scalar_lea.vmem [#allocation14], %s479
        %s481 = sadd.s32 %s34, %s35
        %s482 = smul.u32 2, %s481
        %s483 = sadd.s32 %s34, %s35
        %s484 = smul.u32 2, %s483
        %p485 = scmp.lt.s32.totalorder %s484, 3
        %s486 = scalar_select %p485, %s484, 3
        %s487 = scalar_lea.vmem %s6, %s486
        %s488 = sadd.s32 %s34, %s35
        %s489 = smul.u32 2, %s488
        %p490 = scmp.lt.s32.totalorder %s34, 1
        %s491 = scalar_select %p490, %s34, 1
        %s492 = smul.addr %s491, 8
        %s493 = scalar_lea.vmem %s7, %s492
        %p494 = scmp.lt.s32.totalorder %s34, 1
        %s495 = scalar_select %p494, %s34, 1
        %s496 = smul.addr %s495, 8
        %s497 = scalar_lea.vmem %s8, %s496
        %p498 = scmp.lt.s32.totalorder %s34, 1
        %s499 = scalar_select %p498, %s34, 1
        %s500 = smul.addr %s499, 8
        %s501 = scalar_lea.vmem %s9, %s500
        %s502 = sadd.s32 %s34, %s35
        %s503 = smul.u32 2, %s502
        %p505 = scmp.eq.s32.totalorder %s35, 0
        // Predicated region
        $region65: #{tpu_custom_call.1} parent=47 // pred_check
          %p506 = pneg %p505
        $region66: #{tpu_custom_call.1} parent=47 // pred_check_branch
          %508 = sbr.rel (%p506) target = $region68
        $region67: #{tpu_custom_call.1} parent=47 // pred_region
          %v509 = vld [vmem:[%s0] sm:$0xff]
          %v510 = vld [vmem:[#allocation6] sm:$0xff]
          %v511 = vld [vmem:[#allocation6 + $0x8] sm:$0xff]
          %v512 = vld [vmem:[#allocation6 + $0x10] sm:$0xff]
          %v513 = vld [vmem:[#allocation6 + $0x18] sm:$0xff]
          %v514 = vld [vmem:[#allocation6 + $0x20] sm:$0xff]
          %v515 = vld [vmem:[#allocation6 + $0x28] sm:$0xff]
          %v516 = vld [vmem:[#allocation6 + $0x30] sm:$0xff]
          %v517 = vld [vmem:[#allocation6 + $0x38] sm:$0xff]
          %v518 = vld [vmem:[#allocation6 + $0x40] sm:$0xff]
          %v519 = vld [vmem:[#allocation6 + $0x48] sm:$0xff]
          %v520 = vld [vmem:[#allocation6 + $0x50] sm:$0xff]
          %v521 = vld [vmem:[#allocation6 + $0x58] sm:$0xff]
          %v522 = vld [vmem:[#allocation6 + $0x60] sm:$0xff]
          %v523 = vld [vmem:[#allocation6 + $0x68] sm:$0xff]
          %v524 = vld [vmem:[#allocation6 + $0x70] sm:$0xff]
          %v525 = vld [vmem:[#allocation6 + $0x78] sm:$0xff]
          %v526 = vld [vmem:[#allocation6 + $0x80] sm:$0xff]
          %v527 = vld [vmem:[#allocation6 + $0x88] sm:$0xff]
          %v528 = vld [vmem:[#allocation6 + $0x90] sm:$0xff]
          %v529 = vld [vmem:[#allocation6 + $0x98] sm:$0xff]
          %v530 = vld [vmem:[#allocation6 + $0xa0] sm:$0xff]
          %v531 = vld [vmem:[#allocation6 + $0xa8] sm:$0xff]
          %v532 = vld [vmem:[#allocation6 + $0xb0] sm:$0xff]
          %v533 = vld [vmem:[#allocation6 + $0xb8] sm:$0xff]
          %v534 = vld [vmem:[#allocation6 + $0xc0] sm:$0xff]
          %v535 = vld [vmem:[#allocation6 + $0xc8] sm:$0xff]
          %v536 = vld [vmem:[#allocation6 + $0xd0] sm:$0xff]
          %v537 = vld [vmem:[#allocation6 + $0xd8] sm:$0xff]
          %v538 = vld [vmem:[#allocation6 + $0xe0] sm:$0xff]
          %v539 = vld [vmem:[#allocation6 + $0xe8] sm:$0xff]
          %v540 = vld [vmem:[#allocation6 + $0xf0] sm:$0xff]
          %v541 = vld [vmem:[#allocation6 + $0xf8] sm:$0xff]
          %v542 = vld [vmem:[#allocation6 + $0x100] sm:$0xff]
          %v543 = vld [vmem:[#allocation6 + $0x108] sm:$0xff]
          %v544 = vld [vmem:[#allocation6 + $0x110] sm:$0xff]
          %v545 = vld [vmem:[#allocation6 + $0x118] sm:$0xff]
          %v546 = vld [vmem:[#allocation9] sm:$0x7]
          %v548 = vperm.slane %v546, 0
          %v549 = vperm.slane %v546, 1
          %v550 = vperm.slane %v546, 2
          %vm554 = vcmask 785408
          %v556 = vsel %vm554, %v509, 0
          %558 = vmatpush.msra.mxu0 0.0
          %559 = vmatpush.msra.mxu0 0.0
          %560 = vmatpush.msra.mxu0 0.0
          %561 = vmatpush.msra.mxu0 0.0
          %562 = vmatpush.msra.mxu0 %v543
          %563 = vmatpush.msra.mxu0 %v540
          %564 = vmatpush.msra.mxu0 %v537
          %565 = vmatpush.msra.mxu0 %v534
          %566 = vmatpush.msra.mxu0 %v531
          %567 = vmatpush.msra.mxu0 %v528
          %568 = vmatpush.msra.mxu0 %v525
          %569 = vmatpush.msra.mxu0 %v522
          %570 = vmatpush.msra.mxu0 %v519
          %571 = vmatpush.msra.mxu0 %v516
          %572 = vmatpush.msra.mxu0 %v513
          %573 = vmatpush.msra.mxu0 %v510
          %574 = vmatmul.f32.gmra.mxu0 %v556
          %v575 = vpop.f32.mrf.mxu0
          %v576 = vadd.f32 %v548, %v575
          %577 = vdwg.mxu0
          %578 = vmatpush.msra.mxu0 0.0
          %579 = vmatpush.msra.mxu0 0.0
          %580 = vmatpush.msra.mxu0 0.0
          %581 = vmatpush.msra.mxu0 0.0
          %582 = vmatpush.msra.mxu0 %v544
          %583 = vmatpush.msra.mxu0 %v541
          %584 = vmatpush.msra.mxu0 %v538
          %585 = vmatpush.msra.mxu0 %v535
          %586 = vmatpush.msra.mxu0 %v532
          %587 = vmatpush.msra.mxu0 %v529
          %588 = vmatpush.msra.mxu0 %v526
          %589 = vmatpush.msra.mxu0 %v523
          %590 = vmatpush.msra.mxu0 %v520
          %591 = vmatpush.msra.mxu0 %v517
          %592 = vmatpush.msra.mxu0 %v514
          %593 = vmatpush.msra.mxu0 %v511
          %594 = vmatmul.f32.gmra.mxu0 %v556
          %v595 = vpop.f32.mrf.mxu0
          %v596 = vadd.f32 %v549, %v595
          %597 = vdwg.mxu0
          %598 = vmatpush.msra.mxu0 0.0
          %599 = vmatpush.msra.mxu0 0.0
          %600 = vmatpush.msra.mxu0 0.0
          %601 = vmatpush.msra.mxu0 0.0
          %602 = vmatpush.msra.mxu0 %v545
          %603 = vmatpush.msra.mxu0 %v542
          %604 = vmatpush.msra.mxu0 %v539
          %605 = vmatpush.msra.mxu0 %v536
          %606 = vmatpush.msra.mxu0 %v533
          %607 = vmatpush.msra.mxu0 %v530
          %608 = vmatpush.msra.mxu0 %v527
          %609 = vmatpush.msra.mxu0 %v524
          %610 = vmatpush.msra.mxu0 %v521
          %611 = vmatpush.msra.mxu0 %v518
          %612 = vmatpush.msra.mxu0 %v515
          %613 = vmatpush.msra.mxu0 %v512
          %614 = vmatmul.f32.gmra.mxu0 %v556
          %v615 = vpop.f32.mrf.mxu0
          %v616 = vadd.f32 %v550, %v615
          %617 = vdwg.mxu0
          %v618 = vld [vmem:[#allocation11] sm:$0xff]
          %v619 = vld [vmem:[#allocation11 + $0x8] sm:$0xff]
          %v620 = vld [vmem:[#allocation11 + $0x10] sm:$0xff]
          %v621 = vadd.f32 %v576, %v618
          %v622 = vadd.f32 %v596, %v619
          %v623 = vadd.f32 %v616, %v620
          %v624 = vpack.c.bf16 %v622, %v621
          %v625 = vpack.c.bf16 %v623, %v623
          %626 = vst [vmem:[#allocation2] sm:$0xff] %v624
          %vm627 = vcmask 355328
          %628 = vst.msk [vmem:[#allocation2 + $0x8] sm:$0xf] %vm627, %v625
          %vm629 = vcmask 7168
          %630 = vst.msk [vmem:[#allocation3] sm:$0xff] %vm629, -1e+30
          %631 = vst.msk [vmem:[#allocation4] sm:$0xff] %vm629, 0.0
          %632 = vst.msk [vmem:[#allocation5] sm:$0xff] %vm629, 0.0
        $region68: #{tpu_custom_call.1} parent=47 // pred_fallthru
          _
        %v633 = vld [vmem:[#allocation2] sm:$0xff]
        %v634 = vld [vmem:[#allocation2 + $0x8] sm:$0xf]
        %v635 = vld [vmem:[%s426] sm:$0xff]
        %v636 = vld [vmem:[%s426 + $0x8] sm:$0xff]
        %v637 = vld [vmem:[%s426 + $0x10] sm:$0xff]
        %v638 = vld [vmem:[%s426 + $0x18] sm:$0xff]
        %v639 = vld [vmem:[%s426 + $0x20] sm:$0xff]
        %v640 = vld [vmem:[%s426 + $0x28] sm:$0xff]
        %v641 = vld [vmem:[%s426 + $0x30] sm:$0xff]
        %v642 = vld [vmem:[%s426 + $0x38] sm:$0xff]
        %v643 = vld [vmem:[%s426 + $0x40] sm:$0xff]
        %v644 = vld [vmem:[%s426 + $0x48] sm:$0xff]
        %v645 = vld [vmem:[%s426 + $0x50] sm:$0xff]
        %v646 = vld [vmem:[%s426 + $0x58] sm:$0xff]
        %v647 = vld [vmem:[%s426 + $0x60] sm:$0xff]
        %v648 = vld [vmem:[%s426 + $0x68] sm:$0xff]
        %v649 = vld [vmem:[%s426 + $0x70] sm:$0xff]
        %v650 = vld [vmem:[%s426 + $0x78] sm:$0xff]
        %v651 = vld [vmem:[%s426 + $0x80] sm:$0xff]
        %v652 = vld [vmem:[%s426 + $0x88] sm:$0xff]
        %v653 = vld [vmem:[%s426 + $0x90] sm:$0xff]
        %v654 = vld [vmem:[%s426 + $0x98] sm:$0xff]
        %v655 = vld [vmem:[%s426 + $0xa0] sm:$0xff]
        %v656 = vld [vmem:[%s426 + $0xa8] sm:$0xff]
        %v657 = vld [vmem:[%s426 + $0xb0] sm:$0xff]
        %v658 = vld [vmem:[%s426 + $0xb8] sm:$0xff]
        %v659 = vld [vmem:[%s426 + $0xc0] sm:$0xff]
        %v660 = vld [vmem:[%s426 + $0xc8] sm:$0xff]
        %v661 = vld [vmem:[%s426 + $0xd0] sm:$0xff]
        %v662 = vld [vmem:[%s426 + $0xd8] sm:$0xff]
        %v663 = vld [vmem:[%s426 + $0xe0] sm:$0xff]
        %v664 = vld [vmem:[%s426 + $0xe8] sm:$0xff]
        %v665 = vld [vmem:[%s426 + $0xf0] sm:$0xff]
        %v666 = vld [vmem:[%s426 + $0xf8] sm:$0xff]
        %v667 = vld [vmem:[%s426 + $0x100] sm:$0xff]
        %v668 = vld [vmem:[%s426 + $0x108] sm:$0xff]
        %v669 = vld [vmem:[%s426 + $0x110] sm:$0xff]
        %v670 = vld [vmem:[%s426 + $0x118] sm:$0xff]
        %v671 = vld [vmem:[%s426 + $0x120] sm:$0xff]
        %v672 = vld [vmem:[%s426 + $0x128] sm:$0x33]
        %v673 = vld [vmem:[%s487] sm:$0x3]
        %v675 = vperm.slane %v673, 0
        %v676 = vperm.slane %v673, 1
        %v681 = vunpack.c.l.b16 %v633
        %v682 = vunpack.c.h.b16 %v633
        %v683 = vunpack.c.l.b16 %v634
        %v684 = vpack.c.b16 %v681, %v681
        %v685 = vpack.c.b16 %v682, %v682
        %v686 = vpack.c.b16 %v683, %v683
        %v727 = vunpack.c.l.b16 %v635
        %v728 = vunpack.c.h.b16 %v635
        %v729 = vunpack.c.l.b16 %v636
        %v730 = vunpack.c.h.b16 %v636
        %v731 = vunpack.c.l.b16 %v637
        %v732 = vunpack.c.h.b16 %v637
        %v733 = vunpack.c.l.b16 %v638
        %v734 = vunpack.c.h.b16 %v638
        %v735 = vunpack.c.l.b16 %v639
        %v736 = vunpack.c.h.b16 %v639
        %v737 = vunpack.c.l.b16 %v640
        %v738 = vunpack.c.h.b16 %v640
        %v739 = vunpack.c.l.b16 %v641
        %v740 = vunpack.c.h.b16 %v641
        %v741 = vunpack.c.l.b16 %v642
        %v742 = vunpack.c.h.b16 %v642
        %v743 = vunpack.c.l.b16 %v643
        %v744 = vunpack.c.h.b16 %v643
        %v745 = vunpack.c.l.b16 %v644
        %v746 = vunpack.c.h.b16 %v644
        %v747 = vunpack.c.l.b16 %v645
        %v748 = vunpack.c.h.b16 %v645
        %v749 = vunpack.c.l.b16 %v646
        %v750 = vunpack.c.h.b16 %v646
        %v751 = vunpack.c.l.b16 %v647
        %v752 = vunpack.c.h.b16 %v647
        %v753 = vunpack.c.l.b16 %v648
        %v754 = vunpack.c.h.b16 %v648
        %v755 = vunpack.c.l.b16 %v649
        %v756 = vunpack.c.h.b16 %v649
        %v757 = vunpack.c.l.b16 %v650
        %v758 = vunpack.c.h.b16 %v650
        %v759 = vunpack.c.l.b16 %v651
        %v760 = vunpack.c.h.b16 %v651
        %v761 = vunpack.c.l.b16 %v652
        %v762 = vunpack.c.h.b16 %v652
        %v763 = vunpack.c.l.b16 %v653
        %v764 = vunpack.c.h.b16 %v653
        %v765 = vunpack.c.l.b16 %v654
        %v766 = vunpack.c.h.b16 %v654
        %v767 = vunpack.c.l.b16 %v655
        %v768 = vunpack.c.h.b16 %v655
        %v769 = vunpack.c.l.b16 %v656
        %v770 = vunpack.c.h.b16 %v656
        %v771 = vunpack.c.l.b16 %v657
        %v772 = vunpack.c.h.b16 %v657
        %v773 = vunpack.c.l.b16 %v658
        %v774 = vunpack.c.h.b16 %v658
        %v775 = vunpack.c.l.b16 %v659
        %v776 = vunpack.c.h.b16 %v659
        %v777 = vunpack.c.l.b16 %v660
        %v778 = vunpack.c.h.b16 %v660
        %v779 = vunpack.c.l.b16 %v661
        %v780 = vunpack.c.h.b16 %v661
        %v781 = vunpack.c.l.b16 %v662
        %v782 = vunpack.c.h.b16 %v662
        %v783 = vunpack.c.l.b16 %v663
        %v784 = vunpack.c.h.b16 %v663
        %v785 = vunpack.c.l.b16 %v664
        %v786 = vunpack.c.h.b16 %v664
        %v787 = vunpack.c.l.b16 %v665
        %v788 = vunpack.c.h.b16 %v665
        %v789 = vunpack.c.l.b16 %v666
        %v790 = vunpack.c.h.b16 %v666
        %v791 = vunpack.c.l.b16 %v667
        %v792 = vunpack.c.h.b16 %v667
        %v793 = vunpack.c.l.b16 %v668
        %v794 = vunpack.c.h.b16 %v668
        %v795 = vunpack.c.l.b16 %v669
        %v796 = vunpack.c.h.b16 %v669
        %v797 = vunpack.c.l.b16 %v670
        %v798 = vunpack.c.h.b16 %v670
        %v799 = vunpack.c.l.b16 %v671
        %v800 = vunpack.c.h.b16 %v671
        %v801 = vunpack.c.l.b16 %v672
        %v802 = vunpack.c.h.b16 %v672
        %v803 = vpack.c.b16 %v729, %v727
        %v804 = vpack.c.b16 %v730, %v728
        %v805 = vpack.c.b16 %v733, %v731
        %v806 = vpack.c.b16 %v734, %v732
        %v807 = vpack.c.b16 %v737, %v735
        %v808 = vpack.c.b16 %v738, %v736
        %v809 = vpack.c.b16 %v741, %v739
        %v810 = vpack.c.b16 %v742, %v740
        %v811 = vpack.c.b16 %v745, %v743
        %v812 = vpack.c.b16 %v746, %v744
        %v813 = vpack.c.b16 %v749, %v747
        %v814 = vpack.c.b16 %v750, %v748
        %v815 = vpack.c.b16 %v753, %v751
        %v816 = vpack.c.b16 %v754, %v752
        %v817 = vpack.c.b16 %v757, %v755
        %v818 = vpack.c.b16 %v758, %v756
        %v819 = vpack.c.b16 %v761, %v759
        %v820 = vpack.c.b16 %v762, %v760
        %v821 = vpack.c.b16 %v765, %v763
        %v822 = vpack.c.b16 %v766, %v764
        %v823 = vpack.c.b16 %v769, %v767
        %v824 = vpack.c.b16 %v770, %v768
        %v825 = vpack.c.b16 %v773, %v771
        %v826 = vpack.c.b16 %v774, %v772
        %v827 = vpack.c.b16 %v777, %v775
        %v828 = vpack.c.b16 %v778, %v776
        %v829 = vpack.c.b16 %v781, %v779
        %v830 = vpack.c.b16 %v782, %v780
        %v831 = vpack.c.b16 %v785, %v783
        %v832 = vpack.c.b16 %v786, %v784
        %v833 = vpack.c.b16 %v789, %v787
        %v834 = vpack.c.b16 %v790, %v788
        %v835 = vpack.c.b16 %v793, %v791
        %v836 = vpack.c.b16 %v794, %v792
        %v837 = vpack.c.b16 %v797, %v795
        %v838 = vpack.c.b16 %v798, %v796
        %v839 = vpack.c.b16 %v801, %v799
        %v840 = vpack.c.b16 %v802, %v800
        %vm877 = vcmask 359424
        %v879 = vsel %vm877, %v686, 0
        %vm881 = vcmask 1045504
        %v883 = vsel %vm881, %v839, 0
        %v886 = vsel %vm881, %v840, 0
        %888 = vmatpush.bf16.msra.mxu0 %v817
        %889 = vmatpush.bf16.msra.mxu0 %v815
        %890 = vmatpush.bf16.msra.mxu0 %v813
        %891 = vmatpush.bf16.msra.mxu0 %v811
        %892 = vmatpush.bf16.msra.mxu0 %v809
        %893 = vmatpush.bf16.msra.mxu0 %v807
        %894 = vmatpush.bf16.msra.mxu0 %v805
        %895 = vmatpush.bf16.msra.mxu0 %v803
        %896 = vmatmul.bf16.gmra.mxu0 %v684
        %v897 = vpop.f32.mrf.mxu0
        %v898 = vadd.f32 %v675, %v897
        %v899 = vpop.f32.mrf.mxu0
        %900 = vdwg.mxu0
        %901 = vmatpush.bf16.msra.mxu0 %v833
        %902 = vmatpush.bf16.msra.mxu0 %v831
        %903 = vmatpush.bf16.msra.mxu0 %v829
        %904 = vmatpush.bf16.msra.mxu0 %v827
        %905 = vmatpush.bf16.msra.mxu0 %v825
        %906 = vmatpush.bf16.msra.mxu0 %v823
        %907 = vmatpush.bf16.msra.mxu0 %v821
        %908 = vmatpush.bf16.msra.mxu0 %v819
        %909 = vmatmul.bf16.gmra.mxu0 %v685
        %v910 = vpop.f32.mrf.mxu0
        %v911 = vadd.f32 %v898, %v910
        %v912 = vpop.f32.mrf.mxu0
        %913 = vdwg.mxu0
        %914 = vmatpush.bf16.msra.mxu0 0
        %915 = vmatpush.bf16.msra.mxu0 0
        %916 = vmatpush.bf16.msra.mxu0 0
        %917 = vmatpush.bf16.msra.mxu0 0
        %918 = vmatpush.bf16.msra.mxu0 0
        %919 = vmatpush.bf16.msra.mxu0 %v883
        %920 = vmatpush.bf16.msra.mxu0 %v837
        %921 = vmatpush.bf16.msra.mxu0 %v835
        %922 = vmatmul.bf16.gmra.mxu0 %v879
        %v923 = vpop.f32.mrf.mxu0
        %v924 = vadd.f32 %v911, %v923
        %v925 = vpop.f32.mrf.mxu0
        %926 = vdwg.mxu0
        %927 = vmatpush.bf16.msra.mxu0 %v818
        %928 = vmatpush.bf16.msra.mxu0 %v816
        %929 = vmatpush.bf16.msra.mxu0 %v814
        %930 = vmatpush.bf16.msra.mxu0 %v812
        %931 = vmatpush.bf16.msra.mxu0 %v810
        %932 = vmatpush.bf16.msra.mxu0 %v808
        %933 = vmatpush.bf16.msra.mxu0 %v806
        %934 = vmatpush.bf16.msra.mxu0 %v804
        %935 = vmatmul.bf16.gmra.mxu0 %v684
        %v936 = vpop.f32.mrf.mxu0
        %v937 = vadd.f32 %v676, %v936
        %v938 = vpop.f32.mrf.mxu0
        %939 = vdwg.mxu0
        %940 = vmatpush.bf16.msra.mxu0 %v834
        %941 = vmatpush.bf16.msra.mxu0 %v832
        %942 = vmatpush.bf16.msra.mxu0 %v830
        %943 = vmatpush.bf16.msra.mxu0 %v828
        %944 = vmatpush.bf16.msra.mxu0 %v826
        %945 = vmatpush.bf16.msra.mxu0 %v824
        %946 = vmatpush.bf16.msra.mxu0 %v822
        %947 = vmatpush.bf16.msra.mxu0 %v820
        %948 = vmatmul.bf16.gmra.mxu0 %v685
        %v949 = vpop.f32.mrf.mxu0
        %v950 = vadd.f32 %v937, %v949
        %v951 = vpop.f32.mrf.mxu0
        %952 = vdwg.mxu0
        %953 = vmatpush.bf16.msra.mxu0 0
        %954 = vmatpush.bf16.msra.mxu0 0
        %955 = vmatpush.bf16.msra.mxu0 0
        %956 = vmatpush.bf16.msra.mxu0 0
        %957 = vmatpush.bf16.msra.mxu0 0
        %958 = vmatpush.bf16.msra.mxu0 %v886
        %959 = vmatpush.bf16.msra.mxu0 %v838
        %960 = vmatpush.bf16.msra.mxu0 %v836
        %961 = vmatmul.bf16.gmra.mxu0 %v879
        %v962 = vpop.f32.mrf.mxu0
        %v963 = vadd.f32 %v950, %v962
        %v964 = vpop.f32.mrf.mxu0
        %965 = vdwg.mxu0
        %966 = vst [vmem:[%s480] sm:$0xff] %v924
        %967 = vst [vmem:[%s480 + $0x8] sm:$0xff] %v963
        %v968 = vmax.f32 %v924, %v963
        %969 = vmax.xlane.f32.xlu0 %v968
        %v970 = vpop.xlane.xlu0 %969
        %v971 = vld [vmem:[#allocation3] sm:$0xff]
        %v972 = vmax.f32 %v971, %v970
        %v973 = vld [vmem:[#allocation4] sm:$0xff]
        %v974 = vsub.f32 %v971, %v972
        %v975 = vmul.f32 %v974, 1.442695
        %v976 = vpow.pop %v975
        %v977 = vmul.f32 %v973, %v976
        %979 = vset.pattern.permute.xlu0 0
        %980 = vperm.xlu0 %979, %v972
        %v981 = vpop.permute.xlu0 %980
        %v983 = vsub.f32 %v924, %v981
        %v984 = vsub.f32 %v963, %v981
        %v985 = vmul.f32 %v983, 1.442695
        %v986 = vpow.pop %v985
        %v987 = vmul.f32 %v984, 1.442695
        %v988 = vpow.pop %v987
        %v989 = vadd.f32 %v986, %v988
        %990 = vadd.xlane.f32.xlu0 %v989
        %v991 = vpop.xlane.xlu0 %990
        %v992 = vadd.f32 %v977, %v991
        %vm993 = vcmask 7168
        %994 = vst.msk [vmem:[#allocation4] sm:$0xff] %vm993, %v992
        %995 = vst.msk [vmem:[#allocation3] sm:$0xff] %vm993, %v972
        %s996 = sadd.s32 %s34, %s35
        %s997 = smul.u32 %s996, 256
        %v998 = vlaneseq
        %v999 = vand.u32 %v998, 127
        %v1000 = vadd.s32 %v999, 128
        %v1001 = vstv %s997
        %v1002 = vadd.s32 %v999, %v1001
        %v1003 = vadd.s32 %v1000, %v1001
        %v1004 = vld [vmem:[%s4] sm:$0xff]
        %1005 = vset.pattern.permute.xlu0 0
        %1006 = vperm.xlu0 %1005, %v1004
        %v1007 = vpop.permute.xlu0 %1006
        %vm1008 = vcmp.eq.s32.totalorder %v1002, %v1007
        %vm1009 = vcmp.eq.s32.totalorder %v1003, %v1007
        %v1010 = vld [vmem:[#allocation5] sm:$0xff]
        %v1011 = vsel %vm1008, %v924, 0.0
        %v1012 = vsel %vm1009, %v963, 0.0
        %v1013 = vadd.f32 %v1011, %v1012
        %1014 = vadd.xlane.f32.xlu0 %v1013
        %v1015 = vpop.xlane.xlu0 %1014
        %v1016 = vadd.f32 %v1010, %v1015
        %1017 = vst.msk [vmem:[#allocation5] sm:$0xff] %vm993, %v1016
        // Predicated region
        $region69: #{tpu_custom_call.1} parent=47 // pred_check
          %p1018 = pneg %p505
        $region70: #{tpu_custom_call.1} parent=47 // pred_check_branch
          %1020 = sbr.rel (%p1018) target = $region72
        $region71: #{tpu_custom_call.1} parent=47 // pred_region
          %v1021 = vld [vmem:[#allocation3] sm:$0xff]
          %1022 = vst.msk [vmem:[%s493] sm:$0xff] %vm993, %v1021
          %v1023 = vld [vmem:[#allocation4] sm:$0xff]
          %1024 = vst.msk [vmem:[%s497] sm:$0xff] %vm993, %v1023
          %v1025 = vld [vmem:[#allocation5] sm:$0xff]
          %1026 = vst.msk [vmem:[%s501] sm:$0xff] %vm993, %v1025
        $region72: #{tpu_custom_call.1} parent=47 // pred_fallthru
          _
        %p1027 = scmp.lt.s32.totalorder %s34, 1
        %s1028 = scalar_select %p1027, %s34, 1
        %s1029 = smul.addr %s1028, 8
        %s1030 = scalar_lea.vmem %s7, %s1029
        %p1031 = scmp.lt.s32.totalorder %s34, 1
        %s1032 = scalar_select %p1031, %s34, 1
        %s1033 = smul.addr %s1032, 8
        %s1034 = scalar_lea.vmem %s8, %s1033
        %p1035 = scmp.lt.s32.totalorder %s34, 1
        %s1036 = scalar_select %p1035, %s34, 1
        %s1037 = smul.addr %s1036, 8
        %s1038 = scalar_lea.vmem %s9, %s1037
        %s1039 = sand.u32 %s291, 1
        %s1040 = scalar_lea.sflag [#allocation8], %s1039
        %s1041 = sand.u32 %s291, 1
        %s1042 = smul.addr %s1041, 16
        %s1043 = scalar_lea.vmem [#allocation14], %s1042
        // Predicated region
        $region73: #{tpu_custom_call.1} parent=47 // pred_check
          %p1044 = pneg %p221
        $region74: #{tpu_custom_call.1} parent=47 // pred_check_branch
          %1046 = sbr.rel (%p1044) target = $region76
        $region75: #{tpu_custom_call.1} parent=47 // pred_region
          _
        $region76: #{tpu_custom_call.1} parent=47 // pred_fallthru
          _
        // Predicated region
        $region77: #{tpu_custom_call.1} parent=47 // pred_check
          %p1047 = pneg %p247
        $region78: #{tpu_custom_call.1} parent=47 // pred_check_branch
          %1049 = sbr.rel (%p1047) target = $region80
        $region79: #{tpu_custom_call.1} parent=47 // pred_region
          _
        $region80: #{tpu_custom_call.1} parent=47 // pred_fallthru
          _
        // Predicated region
        $region81: #{tpu_custom_call.1} parent=47 // pred_check
          %p1050 = pneg %p273
        $region82: #{tpu_custom_call.1} parent=47 // pred_check_branch
          %1052 = sbr.rel (%p1050) target = $region84
        $region83: #{tpu_custom_call.1} parent=47 // pred_region
          _
        $region84: #{tpu_custom_call.1} parent=47 // pred_fallthru
          _
        // Predicated region
        $region85: #{tpu_custom_call.1} parent=47 // pred_check
          %p1053 = pneg %p301
        $region86: #{tpu_custom_call.1} parent=47 // pred_check_branch
          %1055 = sbr.rel (%p1053) target = $region88
        $region87: #{tpu_custom_call.1} parent=47 // pred_region
          %s1056 = sadd.s32 %s34, %s35
          %s1057 = smul.u32 2, %s1056
          %1059 = vsyncadd %s1040, 0
          %s1060 = smul.addr %s1057, 8
          %s1061 = scalar_lea.hbm %s10, %s1060
          %s1063 = sshll.u32 %s1043, 4
          %s1064 = int_to_ptr.vmem [resolvable:$true] %s1063
          %s1065 = sshll.u32 %s1061, 4
          %s1066 = int_to_ptr.hbm [resolvable:$true] %s1065
          %1068 = dma.vmem_to_hbm [thread:$0]  %s1064, 256, %s1066, %s1040
        $region88: #{tpu_custom_call.1} parent=47 // pred_fallthru
          _
      $region48: #{tpu_custom_call.1} parent=5 // pred_fallthru
        _
      %p1069 = scmp.le.s32.totalorder 2, %s25
      // Predicated region
      $region89: #{tpu_custom_call.1} parent=5 // pred_check
        %p1070 = pneg %p1069
      $region90: #{tpu_custom_call.1} parent=5 // pred_check_branch
        %1072 = sbr.rel (%p1070) target = $region92
      $region91: #{tpu_custom_call.1} parent=5 // pred_region
        %s1073 = ssub.s32 %s25, 2
        // Predicated region
        $region93: #{tpu_custom_call.1} parent=91 // pred_check
          %p1074 = pneg %p227
        $region94: #{tpu_custom_call.1} parent=91 // pred_check_branch
          %1076 = sbr.rel (%p1074) target = $region96
        $region95: #{tpu_custom_call.1} parent=91 // pred_region
          %p1077 = scmp.lt.s32.totalorder %s36, 1
          %s1078 = scalar_select %p1077, %s36, 1
          %s1079 = smul.addr %s1078, 8
          %s1080 = scalar_lea.vmem %s7, %s1079
        $region96: #{tpu_custom_call.1} parent=91 // pred_fallthru
          _
        // Predicated region
        $region97: #{tpu_custom_call.1} parent=91 // pred_check
          %p1081 = pneg %p253
        $region98: #{tpu_custom_call.1} parent=91 // pred_check_branch
          %1083 = sbr.rel (%p1081) target = $region100
        $region99: #{tpu_custom_call.1} parent=91 // pred_region
          %p1084 = scmp.lt.s32.totalorder %s36, 1
          %s1085 = scalar_select %p1084, %s36, 1
          %s1086 = smul.addr %s1085, 8
          %s1087 = scalar_lea.vmem %s8, %s1086
        $region100: #{tpu_custom_call.1} parent=91 // pred_fallthru
          _
        // Predicated region
        $region101: #{tpu_custom_call.1} parent=91 // pred_check
          %p1088 = pneg %p279
        $region102: #{tpu_custom_call.1} parent=91 // pred_check_branch
          %1090 = sbr.rel (%p1088) target = $region104
        $region103: #{tpu_custom_call.1} parent=91 // pred_region
          %p1091 = scmp.lt.s32.totalorder %s36, 1
          %s1092 = scalar_select %p1091, %s36, 1
          %s1093 = smul.addr %s1092, 8
          %s1094 = scalar_lea.vmem %s9, %s1093
        $region104: #{tpu_custom_call.1} parent=91 // pred_fallthru
          _
        // Predicated region
        $region105: #{tpu_custom_call.1} parent=91 // pred_check
          %p1095 = pneg %p307
        $region106: #{tpu_custom_call.1} parent=91 // pred_check_branch
          %1097 = sbr.rel (%p1095) target = $region108
        $region107: #{tpu_custom_call.1} parent=91 // pred_region
          %s1098 = sand.u32 %s292, 1
          %s1099 = scalar_lea.sflag [#allocation8], %s1098
          %s1100 = sand.u32 %s292, 1
          %s1101 = smul.addr %s1100, 16
          %s1102 = scalar_lea.vmem [#allocation14], %s1101
          %1104 = dma.done %s1099, 256
        $region108: #{tpu_custom_call.1} parent=91 // pred_fallthru
          _
      $region92: #{tpu_custom_call.1} parent=5 // pred_fallthru
        _
    $region6: #{tpu_custom_call.1} parent=1 // loop_footer
      %s29 = sadd.s32 1, %s25
    $region7: #{tpu_custom_call.1} parent=1 // loop_footer_branch
      %24 = sbr.rel target = $region3
    $region8: #{tpu_custom_call.1} parent=1 // loop_exit
      _
    %1105 = vsyncpa [#allocation7], 1
    %s1106 = scalar_lea.sflag [#allocation7], 1
    %1107 = vsyncpa %s1106, 1
    %1108 = vsyncpa [#allocation10], 1
    %1109 = vsyncpa [#allocation13], 1
    %s1110 = scalar_lea.sflag [#allocation13], 1
    %1111 = vsyncpa %s1110, 1
    %1112 = vsyncpa [#allocation8], 1
    %s1113 = scalar_lea.sflag [#allocation8], 1
    %1114 = vsyncpa %s1113, 1

</llo_original>
